<compile_context>
chip_gen: v5e
topology: v5e:2x2
jax: 0.10.0
libtpu: 0.0.40
codegen_flags: <defaults>
</compile_context>

<pallas_src>
import jax
import jax.numpy as jnp
from jax.experimental import pallas as pl
from jax.experimental.pallas import tpu as pltpu


# ----------------------------------------------------------------------------
# Shape bookkeeping (exact module semantics)
# ----------------------------------------------------------------------------
def _effective_end_dim(end_dim: int, ndim: int) -> int:
    """Reproduce the module's end_dim adjustment, then normalize to positive."""
    if end_dim == -1 or end_dim == ndim or end_dim == ndim - 1:
        end_dim = -2
    if end_dim < 0:
        end_dim = ndim + end_dim
    return end_dim


def _flatten_out_shape(shape, start_dim: int, end_dim: int):
    ndim = len(shape)
    if start_dim < 0:
        start_dim = ndim + start_dim
    end = _effective_end_dim(end_dim, ndim)
    if start_dim > end:
        # torch.flatten raises in this situation; mirror that instead of
        # silently inserting a size-1 dim.
        raise ValueError(
            f"flatten: start_dim ({start_dim}) > effective end_dim ({end})")
    flat = 1
    for d in shape[start_dim:end + 1]:
        flat *= d
    return tuple(shape[:start_dim]) + (flat,) + tuple(shape[end + 1:])


# ----------------------------------------------------------------------------
# Lane-dense copy kernel (identical in/out layout, no in-kernel reshape)
# ----------------------------------------------------------------------------
def _copy_kernel(x_ref, o_ref):
    o_ref[...] = x_ref[...]


def _choose_layout(n: int, itemsize: int):
    """Pick a lane-dense 2D layout (rows, lane) and a row tile size.

    Precondition: n % 128 == 0 (other sizes take the kernel-free path).
      * lane: largest multiple-of-128 divisor of n, capped at 512 (lane width
        beyond 128 buys nothing by itself; what matters is tile bytes).
      * tile_rows: ~4 MiB per buffer, but capped so the grid has >= ~8 steps
        on medium inputs (v7x splits a "parallel" axis across its 2 TCs and
        a 1-step grid forfeits in/out DMA overlap).
    The grid uses cdiv + partial edge blocks, so no padding is ever needed.
    """
    lane = 128
    for cand in (512, 384, 256, 128):
        if n % cand == 0:
            lane = cand
            break
    rows = n // lane
    if rows <= 8:
        tile_rows = rows                      # tiny input: single full block
    else:
        target_tile_bytes = 4 << 20           # ~4 MiB/buffer
        by_bytes = max(8, (target_tile_bytes // (lane * itemsize)) // 8 * 8)
        by_steps = max(8, (rows // 8) // 8 * 8)   # aim for >= ~8 grid steps
        tile_rows = min(by_bytes, by_steps)
    return lane, rows, tile_rows


def _lane_dense_copy(flat2d, tile_rows: int):
    rows, lane = flat2d.shape
    grid = pl.cdiv(rows, tile_rows)
    n_bytes = rows * lane * flat2d.dtype.itemsize
    return pl.pallas_call(
        _copy_kernel,
        out_shape=jax.ShapeDtypeStruct((rows, lane), flat2d.dtype),
        grid_spec=pltpu.PrefetchScalarGridSpec(
            num_scalar_prefetch=0,
            grid=(grid,),
            in_specs=[pl.BlockSpec((tile_rows, lane), lambda i: (i, 0))],
            out_specs=pl.BlockSpec((tile_rows, lane), lambda i: (i, 0)),
        ),
        compiler_params=pltpu.CompilerParams(
            dimension_semantics=("parallel",),
            vmem_limit_bytes=32 << 20,  # 4 arrays x <=4 MiB tiles fits easily
        ),
        cost_estimate=pl.CostEstimate(
            flops=0, transcendentals=0, bytes_accessed=2 * n_bytes),
    )(flat2d)


# ----------------------------------------------------------------------------
# Flatten block (forward)
# ----------------------------------------------------------------------------
def pallas_flatten(x, start_dim: int = 1, end_dim: int = -1, use_kernel: bool = True):
    """Flatten(start_dim, end_dim) forward with the module's end_dim shift."""
    out_shape = _flatten_out_shape(x.shape, start_dim, end_dim)

    n = x.size
    # Flatten of a contiguous array is metadata-only; the kernel is exercised
    # only when requested and the element count is lane-alignable without any
    # padding/slicing HBM passes.
    if (not use_kernel) or n == 0 or (n % 128 != 0):
        return jnp.reshape(x, out_shape)

    lane, rows, tile_rows = _choose_layout(n, x.dtype.itemsize)
    flat2d = jnp.reshape(x, (rows, lane))      # metadata-only, no pad
    out2d = _lane_dense_copy(flat2d, tile_rows)
    return jnp.reshape(out2d, out_shape)       # metadata-only, no slice


# ----------------------------------------------------------------------------
# NIR2LavaDLNetwork forward: sequentially apply blocks
# ----------------------------------------------------------------------------
def nir2lava_forward(spike, blocks):
    for block in blocks:
        if callable(block):
            spike = block(spike)
        else:
            raise Exception("Unknown block type")
    return spike


if __name__ == "__main__":
    key = jax.random.PRNGKey(0)

    # Small lava-style input: (B, C, H, W, T) -> single-step kernel path.
    B, C, H, W, T = 2, 4, 8, 8, 5
    x = jax.random.normal(key, (B, C, H, W, T), dtype=jnp.float32)

    blocks = [lambda s: pallas_flatten(s, start_dim=1, end_dim=-1)]
    out = nir2lava_forward(x, blocks)
    out = jax.block_until_ready(out)

    ref = jnp.reshape(x, (B, C * H * W, T))
    assert out.shape == ref.shape, (out.shape, ref.shape)
    assert out.dtype == ref.dtype
    assert bool(jnp.all(out == ref))

    # Slightly larger input that exercises the multi-step ("parallel") grid
    # and the partial-edge-block path.
    key2 = jax.random.PRNGKey(1)
    B2, C2, H2, W2, T2 = 2, 8, 16, 16, 8
    x2 = jax.random.normal(key2, (B2, C2, H2, W2, T2), dtype=jnp.float32)
    out2 = jax.block_until_ready(pallas_flatten(x2, 1, -1))
    ref2 = jnp.reshape(x2, (B2, C2 * H2 * W2, T2))
    assert out2.shape == ref2.shape
    assert bool(jnp.all(out2 == ref2))

    # Odd element count: metadata-only fast path (no kernel, no pad/slice).
    key3 = jax.random.PRNGKey(2)
    x3 = jax.random.normal(key3, (2, 3, 5, 5, 7), dtype=jnp.float32)
    out3 = jax.block_until_ready(pallas_flatten(x3, 1, -1))
    ref3 = jnp.reshape(x3, (2, 3 * 5 * 5, 7))
    assert out3.shape == ref3.shape
    assert bool(jnp.all(out3 == ref3))

    print("KERNEL_OK")
</pallas_src>

<mosaic_0001>
module attributes {stable_mosaic.version = 11 : i64} {
  func.func @_copy_kernel(%arg0: i32, %arg1: memref<5x512xf32, #tpu.memory_space<vmem>>, %arg2: memref<5x512xf32, #tpu.memory_space<vmem>>) attributes {dimension_semantics = [#tpu.dimension_semantics<parallel>], iteration_bounds = array<i64: 1>, scalar_prefetch = 0 : i64, scratch_operands = 0 : i64, tpu.core_type = #tpu.core_type<tc>, window_params = [{transform_indices = @transform_0, window_bounds = array<i64: 5, 512>}, {transform_indices = @transform_1, window_bounds = array<i64: 5, 512>}]} {
    %c0 = arith.constant 0 : index
    %c0_0 = arith.constant 0 : index
    %0 = vector.load %arg1[%c0, %c0_0] : memref<5x512xf32, #tpu.memory_space<vmem>>, vector<5x512xf32>
    %c0_1 = arith.constant 0 : index
    %c0_2 = arith.constant 0 : index
    %1 = vector.load %arg2[%c0_1, %c0_2] : memref<5x512xf32, #tpu.memory_space<vmem>>, vector<5x512xf32>
    tpu.vector_store %arg2[%c0_1, %c0_2], %0 {strides = array<i32>} : memref<5x512xf32, #tpu.memory_space<vmem>>, vector<5x512xf32>,
    return
  }
  func.func @transform_0(%arg0: i32) -> (i32, i32) {
    %c0_i32 = arith.constant 0 : i32
    %c0_i32_0 = arith.constant 0 : i32
    return %arg0, %c0_i32 : i32, i32
  }
  func.func @transform_1(%arg0: i32) -> (i32, i32) {
    %c0_i32 = arith.constant 0 : i32
    %c0_i32_0 = arith.constant 0 : i32
    return %arg0, %c0_i32 : i32, i32
  }
}

</mosaic_0001>

<llo_original>
// kernel: tpu_custom_call.1
$region0: #{tpu_custom_call.1}
  #allocation0 [shape = 'u32[]', space=smem, size = 0x4, offset = 0x4, fixed_abs, tag = 'smem constant byte address 0x4 - core index']
  #allocation1 [shape = 'u32[72,128]{1,0:T(1,128)}', space=vmem, size = 0x9000, scoped, tag = 'internal scratch']
  %s0 = inlined_call_operand.hbm [shape: f32[5,512], index: 0, kind: input, shape index: {}]
  %s1 = inlined_call_operand.hbm [shape: f32[5,512], index: 1, kind: output, shape index: {}]
  %s2 = sld [smem:[#allocation0]]
  $region18: #{tpu_custom_call.1} parent=0
    _
  %s4 = ssub.s32 1, %s2
  %s5 = scalar_select 0, %s4, %s2
  $region1: #{tpu_custom_call.1} parent=0
    #allocation2 [shape = 'u8[16384]{0}', space=vmem, size = 0x4000, scoped, tag = 'input window, operand 0, single buffered']
    #allocation3 [shape = 's32[1]{0}', space=sflag, size = 0x4, scoped, tag = 'scoped memory for tpu_custom_call.1']
    #allocation4 [shape = 's32[1]{0}', space=sflag, size = 0x4, scoped, tag = 'scoped memory for tpu_custom_call.1']
    #allocation5 [shape = 'u8[16384]{0}', space=vmem, size = 0x4000, scoped, tag = 'output window, operand 0, single buffered']
    %6 = vsyncpa [#allocation3], 0
    %7 = vsyncpa [#allocation4], 0
    // Predicated region
    $region2: #{tpu_custom_call.1} parent=1 // pred_check
      _
    $region3: #{tpu_custom_call.1} parent=1 // pred_check_branch
      %9 = sbr.rel (0) target = $region5
    $region4: #{tpu_custom_call.1} parent=1 // pred_region
      %11 = vsyncadd [#allocation3], 0
      %s13 = sshll.u32 %s0, 4
      %s14 = int_to_ptr.hbm [resolvable:$true] %s13
      %s15 = sshll.u32 [#allocation2], 4
      %s16 = int_to_ptr.vmem [resolvable:$true] %s15
      %18 = dma.hbm_to_vmem [thread:$0]  %s14, 512, %s16, [#allocation3]
    $region5: #{tpu_custom_call.1} parent=1 // pred_fallthru
      _
    // Predicated region
    $region6: #{tpu_custom_call.1} parent=1 // pred_check
      _
    $region7: #{tpu_custom_call.1} parent=1 // pred_check_branch
      %20 = sbr.rel (0) target = $region9
    $region8: #{tpu_custom_call.1} parent=1 // pred_region
      %22 = dma.done [#allocation3], 512
    $region9: #{tpu_custom_call.1} parent=1 // pred_fallthru
      _
    %v23 = vld [vmem:[#allocation2] sm:$0x1f]
    %v24 = vld [vmem:[#allocation2 + $0x8] sm:$0x1f]
    %v25 = vld [vmem:[#allocation2 + $0x10] sm:$0x1f]
    %v26 = vld [vmem:[#allocation2 + $0x18] sm:$0x1f]
    %27 = vst [vmem:[#allocation5] sm:$0x1f] %v23
    %28 = vst [vmem:[#allocation5 + $0x8] sm:$0x1f] %v24
    %29 = vst [vmem:[#allocation5 + $0x10] sm:$0x1f] %v25
    %30 = vst [vmem:[#allocation5 + $0x18] sm:$0x1f] %v26
    // Predicated region
    $region10: #{tpu_custom_call.1} parent=1 // pred_check
      _
    $region11: #{tpu_custom_call.1} parent=1 // pred_check_branch
      %32 = sbr.rel (0) target = $region13
    $region12: #{tpu_custom_call.1} parent=1 // pred_region
      %34 = vsyncadd [#allocation4], 0
      %s36 = sshll.u32 [#allocation5], 4
      %s37 = int_to_ptr.vmem [resolvable:$true] %s36
      %s38 = sshll.u32 %s1, 4
      %s39 = int_to_ptr.hbm [resolvable:$true] %s38
      %41 = dma.vmem_to_hbm [thread:$0]  %s37, 512, %s39, [#allocation4]
    $region13: #{tpu_custom_call.1} parent=1 // pred_fallthru
      _
    // Predicated region
    $region14: #{tpu_custom_call.1} parent=1 // pred_check
      _
    $region15: #{tpu_custom_call.1} parent=1 // pred_check_branch
      %43 = sbr.rel (0) target = $region17
    $region16: #{tpu_custom_call.1} parent=1 // pred_region
      %45 = dma.done [#allocation4], 512
    $region17: #{tpu_custom_call.1} parent=1 // pred_fallthru
      _
    %46 = vsyncpa [#allocation3], 1
    %47 = vsyncpa [#allocation4], 1

</llo_original>
